<compile_context>
chip_gen: v5e
topology: v5e:2x2
jax: 0.10.0
libtpu: 0.0.40
codegen_flags: <defaults>
</compile_context>

<pallas_src>
import numpy as np
import jax
import jax.numpy as jnp
from jax.experimental import pallas as pl
from jax.experimental.pallas import tpu as pltpu

NUM_CLASSES = 88
NCPAD = 128          # lane-dense padded class dim (88 -> 128), sliced in wrapper
HIDDEN = 32
KSIZE = 3


def _make_kernel(bblk, h, w):
    inv_hw = 1.0 / float(h * w)

    def kernel(img_ref, wt_ref, b1t_ref, w2t_ref, b2_ref, out_ref):
        # img_ref : [BBLK, H+2, (W+2)*C]   bf16  (padded image, W/C flattened to lanes)
        # wt_ref  : [3, (W+2)*C, W*HIDDEN] bf16  (Toeplitz-expanded conv weight)
        # b1t_ref : [1, W*HIDDEN]          f32
        # w2t_ref : [W*HIDDEN, NCPAD]      f32   (GAP-over-W folded head weight)
        # b2_ref  : [1, NCPAD]             f32
        # out_ref : [1, BBLK, NCPAD]       f32
        pooled = []
        for b in range(bblk):
            xi = img_ref[b]                                     # [H+2, (W+2)*C] bf16
            # 3x3 conv == 3 accumulating row-shifted matmuls (MXU, f32 accumulate).
            acc = jnp.dot(xi[0:h, :], wt_ref[0],
                          preferred_element_type=jnp.float32)   # [H, W*HIDDEN] f32
            for dh in range(1, KSIZE):
                acc = acc + jnp.dot(xi[dh:dh + h, :], wt_ref[dh],
                                    preferred_element_type=jnp.float32)
            act = jnp.maximum(acc + b1t_ref[...], 0.0)          # bias + ReLU (f32 VPU)
            # Global average pool: sum over H here; sum over W is folded into w2t.
            pooled.append(jnp.sum(act, axis=0, keepdims=True) * inv_hw)
        s = jnp.concatenate(pooled, axis=0)                     # [BBLK, W*HIDDEN] f32
        out_ref[0] = (jnp.dot(s, w2t_ref[...],
                              preferred_element_type=jnp.float32)
                      + b2_ref[...])                            # [BBLK, NCPAD]

    return kernel


def mvtec_forward(x_nchw, params):
    w1, b1, w2, b2 = params          # w1:[3,3,C,HID], b1:[HID], w2:[HID,88], b2:[88]
    B, C, H, W = x_nchw.shape

    # ---- host-side layout prep (image goes to HBM once; no 9x im2col blowup) ----
    x_nhwc = jnp.transpose(x_nchw, (0, 2, 3, 1)).astype(jnp.float32)
    xpad = jnp.pad(x_nhwc, ((0, 0), (1, 1), (1, 1), (0, 0)))          # [B,H+2,W+2,C]
    img = xpad.reshape(B, H + 2, (W + 2) * C).astype(jnp.bfloat16)

    # Toeplitz-expand the conv weight along W so the conv becomes 3 row matmuls:
    #   wt[dh, wp*C + c, w*HIDDEN + o] = w1[dh, dw, c, o]  where wp == w + dw
    E = np.zeros((KSIZE, W + 2, W), np.float32)
    for dw in range(KSIZE):
        E[dw, dw + np.arange(W), np.arange(W)] = 1.0
    wt = jnp.einsum("xpw,dxco->dpcwo", jnp.asarray(E), w1)
    wt = wt.reshape(KSIZE, (W + 2) * C, W * HIDDEN).astype(jnp.bfloat16)

    b1t = jnp.tile(b1.reshape(1, HIDDEN), (1, W))                     # [1, W*HIDDEN]
    # Fold the "sum over W" half of GAP into the head weight; pad classes 88 -> 128.
    w2t = jnp.pad(jnp.tile(w2, (W, 1)),
                  ((0, 0), (0, NCPAD - NUM_CLASSES)))                 # [W*HID, 128]
    b2p = jnp.pad(b2.reshape(1, NUM_CLASSES),
                  ((0, 0), (0, NCPAD - NUM_CLASSES)))                 # [1, 128]

    # Batch blocking: >=2 grid steps when B>=2 (both v7x TCs), block several
    # images per step to amortize per-step overhead (cap unroll at 8).
    bblk = 1 if B <= 1 else min(8, pl.cdiv(B, 2))
    steps = pl.cdiv(B, bblk)
    bpad = steps * bblk
    if bpad != B:
        img = jnp.pad(img, ((0, bpad - B), (0, 0), (0, 0)))

    out = pl.pallas_call(
        _make_kernel(bblk, H, W),
        out_shape=jax.ShapeDtypeStruct((steps, bblk, NCPAD), jnp.float32),
        grid=(steps,),
        in_specs=[
            pl.BlockSpec((bblk, H + 2, (W + 2) * C), lambda s: (s, 0, 0)),
            pl.BlockSpec((KSIZE, (W + 2) * C, W * HIDDEN), lambda s: (0, 0, 0)),
            pl.BlockSpec((1, W * HIDDEN), lambda s: (0, 0)),
            pl.BlockSpec((W * HIDDEN, NCPAD), lambda s: (0, 0)),
            pl.BlockSpec((1, NCPAD), lambda s: (0, 0)),
        ],
        out_specs=pl.BlockSpec((1, bblk, NCPAD), lambda s: (s, 0, 0)),
        compiler_params=pltpu.CompilerParams(
            dimension_semantics=("parallel",)),
    )(img, wt, b1t, w2t, b2p)

    return out.reshape(bpad, NCPAD)[:B, :NUM_CLASSES]


def reference_forward(x_nchw, params):
    """Pure-JAX reference mirroring the kernel numerics (bf16 conv inputs, f32 math)."""
    w1, b1, w2, b2 = params
    B, C, H, W = x_nchw.shape
    x_nhwc = jnp.transpose(x_nchw, (0, 2, 3, 1)).astype(jnp.float32)
    xp = jnp.pad(x_nhwc, ((0, 0), (1, 1), (1, 1), (0, 0))).astype(jnp.bfloat16)
    cols = []
    for dh in range(KSIZE):
        for dw in range(KSIZE):
            cols.append(xp[:, dh:dh + H, dw:dw + W, :])
    patches = jnp.stack(cols, axis=3).reshape(B, H * W, KSIZE * KSIZE * C)
    w1m = w1.reshape(KSIZE * KSIZE * C, HIDDEN).astype(jnp.bfloat16)
    h = jnp.maximum(jnp.dot(patches, w1m, preferred_element_type=jnp.float32)
                    + b1.reshape(1, 1, HIDDEN), 0.0)
    g = jnp.mean(h, axis=1)                                           # [B, HIDDEN] f32
    return jnp.dot(g, w2, preferred_element_type=jnp.float32) + b2.reshape(1, -1)


def init_params(key, c_in):
    k1, k2, k3, k4 = jax.random.split(key, 4)
    w1 = jax.random.normal(k1, (KSIZE, KSIZE, c_in, HIDDEN), jnp.float32) * 0.05
    b1 = jax.random.normal(k2, (HIDDEN,), jnp.float32) * 0.01
    w2 = jax.random.normal(k3, (HIDDEN, NUM_CLASSES), jnp.float32) * 0.05
    b2 = jax.random.normal(k4, (NUM_CLASSES,), jnp.float32) * 0.01
    return (w1, b1, w2, b2)


if __name__ == "__main__":
    key = jax.random.PRNGKey(0)
    kx, kp = jax.random.split(key)

    B, C, H, W = 2, 4, 16, 16                      # NCHW like the PyTorch module
    x = jax.random.normal(kx, (B, C, H, W), jnp.float32)
    params = init_params(kp, C)

    out = jax.jit(mvtec_forward)(x, params)
    out = jax.block_until_ready(out)

    ref = reference_forward(x, params)
    assert out.shape == (B, NUM_CLASSES), out.shape
    assert jnp.allclose(out, ref, atol=1e-4, rtol=1e-4), \
        float(jnp.max(jnp.abs(out - ref)))

    print("KERNEL_OK")
</pallas_src>

<mosaic_0001>
module attributes {stable_mosaic.version = 11 : i64} {
  func.func @kernel(%arg0: i32, %arg1: memref<1x18x72xbf16, #tpu.memory_space<vmem>>, %arg2: memref<3x72x512xbf16, #tpu.memory_space<vmem>>, %arg3: memref<1x512xf32, #tpu.memory_space<vmem>>, %arg4: memref<512x128xf32, #tpu.memory_space<vmem>>, %arg5: memref<1x128xf32, #tpu.memory_space<vmem>>, %arg6: memref<1x1x128xf32, #tpu.memory_space<vmem>>) attributes {dimension_semantics = [#tpu.dimension_semantics<parallel>], iteration_bounds = array<i64: 2>, scalar_prefetch = 0 : i64, scratch_operands = 0 : i64, tpu.core_type = #tpu.core_type<tc>, window_params = [{transform_indices = @transform_0, window_bounds = array<i64: 1, 18, 72>}, {pipeline_mode = #tpu.pipeline_mode<synchronous>, transform_indices = @transform_1, window_bounds = array<i64: 3, 72, 512>}, {pipeline_mode = #tpu.pipeline_mode<synchronous>, transform_indices = @transform_2, window_bounds = array<i64: 1, 512>}, {pipeline_mode = #tpu.pipeline_mode<synchronous>, transform_indices = @transform_3, window_bounds = array<i64: 512, 128>}, {pipeline_mode = #tpu.pipeline_mode<synchronous>, transform_indices = @transform_4, window_bounds = array<i64: 1, 128>}, {transform_indices = @transform_5, window_bounds = array<i64: 1, 1, 128>}]} {
    %c0 = arith.constant 0 : index
    %c0_0 = arith.constant 0 : index
    %c0_1 = arith.constant 0 : index
    %0 = vector.load %arg1[%c0, %c0_0, %c0_1] : memref<1x18x72xbf16, #tpu.memory_space<vmem>>, vector<1x18x72xbf16>
    %1 = vector.shape_cast %0 : vector<1x18x72xbf16> to vector<18x72xbf16>
    %2 = vector.extract_strided_slice %1 {offsets = [0, 0], sizes = [16, 72], strides = [1, 1]} : vector<18x72xbf16> to vector<16x72xbf16>
    %c0_2 = arith.constant 0 : index
    %c0_3 = arith.constant 0 : index
    %c0_4 = arith.constant 0 : index
    %3 = vector.load %arg2[%c0_2, %c0_3, %c0_4] : memref<3x72x512xbf16, #tpu.memory_space<vmem>>, vector<1x72x512xbf16>
    %4 = vector.shape_cast %3 : vector<1x72x512xbf16> to vector<72x512xbf16>
    %cst = arith.constant dense<0.000000e+00> : vector<16x512xf32>
    %5 = tpu.matmul %2, %4, %cst {dimension_numbers = #tpu.dot_dimension_numbers<[1], [0], [0], [1], [0, 0, 1, 1], [], []>} : vector<16x72xbf16>, vector<72x512xbf16>, vector<16x512xf32> -> vector<16x512xf32>
    %6 = vector.extract_strided_slice %1 {offsets = [1, 0], sizes = [16, 72], strides = [1, 1]} : vector<18x72xbf16> to vector<16x72xbf16>
    %c1 = arith.constant 1 : index
    %c0_5 = arith.constant 0 : index
    %c0_6 = arith.constant 0 : index
    %7 = vector.load %arg2[%c1, %c0_5, %c0_6] : memref<3x72x512xbf16, #tpu.memory_space<vmem>>, vector<1x72x512xbf16>
    %8 = vector.shape_cast %7 : vector<1x72x512xbf16> to vector<72x512xbf16>
    %cst_7 = arith.constant dense<0.000000e+00> : vector<16x512xf32>
    %9 = tpu.matmul %6, %8, %cst_7 {dimension_numbers = #tpu.dot_dimension_numbers<[1], [0], [0], [1], [0, 0, 1, 1], [], []>} : vector<16x72xbf16>, vector<72x512xbf16>, vector<16x512xf32> -> vector<16x512xf32>
    %10 = arith.addf %5, %9 : vector<16x512xf32>
    %11 = vector.extract_strided_slice %1 {offsets = [2, 0], sizes = [16, 72], strides = [1, 1]} : vector<18x72xbf16> to vector<16x72xbf16>
    %c2 = arith.constant 2 : index
    %c0_8 = arith.constant 0 : index
    %c0_9 = arith.constant 0 : index
    %12 = vector.load %arg2[%c2, %c0_8, %c0_9] : memref<3x72x512xbf16, #tpu.memory_space<vmem>>, vector<1x72x512xbf16>
    %13 = vector.shape_cast %12 : vector<1x72x512xbf16> to vector<72x512xbf16>
    %cst_10 = arith.constant dense<0.000000e+00> : vector<16x512xf32>
    %14 = tpu.matmul %11, %13, %cst_10 {dimension_numbers = #tpu.dot_dimension_numbers<[1], [0], [0], [1], [0, 0, 1, 1], [], []>} : vector<16x72xbf16>, vector<72x512xbf16>, vector<16x512xf32> -> vector<16x512xf32>
    %15 = arith.addf %10, %14 : vector<16x512xf32>
    %c0_11 = arith.constant 0 : index
    %c0_12 = arith.constant 0 : index
    %16 = vector.load %arg3[%c0_11, %c0_12] : memref<1x512xf32, #tpu.memory_space<vmem>>, vector<1x512xf32>
    %17 = vector.broadcast %16 : vector<1x512xf32> to vector<16x512xf32>
    %18 = arith.addf %15, %17 : vector<16x512xf32>
    %cst_13 = arith.constant 0.000000e+00 : f32
    %19 = vector.broadcast %cst_13 : f32 to vector<16x512xf32>
    %20 = arith.maximumf %18, %19 : vector<16x512xf32>
    %cst_14 = arith.constant dense<0.000000e+00> : vector<512xf32>
    %21 = vector.multi_reduction <add>, %20, %cst_14 [0] : vector<16x512xf32> to vector<512xf32>
    %22 = vector.shape_cast %21 : vector<512xf32> to vector<1x512xf32>
    %cst_15 = arith.constant 3.906250e-03 : f32
    %23 = vector.broadcast %cst_15 : f32 to vector<1x512xf32>
    %24 = arith.mulf %22, %23 : vector<1x512xf32>
    %c0_16 = arith.constant 0 : index
    %c0_17 = arith.constant 0 : index
    %25 = vector.load %arg4[%c0_16, %c0_17] : memref<512x128xf32, #tpu.memory_space<vmem>>, vector<512x128xf32>
    %cst_18 = arith.constant dense<0.000000e+00> : vector<1x128xf32>
    %26 = tpu.matmul %24, %25, %cst_18 {dimension_numbers = #tpu.dot_dimension_numbers<[1], [0], [0], [1], [0, 0, 1, 1], [], []>} : vector<1x512xf32>, vector<512x128xf32>, vector<1x128xf32> -> vector<1x128xf32>
    %c0_19 = arith.constant 0 : index
    %c0_20 = arith.constant 0 : index
    %27 = vector.load %arg5[%c0_19, %c0_20] : memref<1x128xf32, #tpu.memory_space<vmem>>, vector<1x128xf32>
    %28 = arith.addf %26, %27 : vector<1x128xf32>
    %c0_21 = arith.constant 0 : index
    %c0_22 = arith.constant 0 : index
    %c0_23 = arith.constant 0 : index
    %29 = vector.load %arg6[%c0_21, %c0_22, %c0_23] : memref<1x1x128xf32, #tpu.memory_space<vmem>>, vector<1x1x128xf32>
    %30 = vector.shape_cast %29 : vector<1x1x128xf32> to vector<1x128xf32>
    %31 = vector.shape_cast %28 : vector<1x128xf32> to vector<1x1x128xf32>
    tpu.vector_store %arg6[%c0_21, %c0_22, %c0_23], %31 {strides = array<i32>} : memref<1x1x128xf32, #tpu.memory_space<vmem>>, vector<1x1x128xf32>,
    return
  }
  func.func @transform_0(%arg0: i32) -> (i32, i32, i32) {
    %c0_i32 = arith.constant 0 : i32
    %c0_i32_0 = arith.constant 0 : i32
    %c0_i32_1 = arith.constant 0 : i32
    return %arg0, %c0_i32, %c0_i32_0 : i32, i32, i32
  }
  func.func @transform_1(%arg0: i32) -> (i32, i32, i32) {
    %c0_i32 = arith.constant 0 : i32
    %c0_i32_0 = arith.constant 0 : i32
    %c0_i32_1 = arith.constant 0 : i32
    %c0_i32_2 = arith.constant 0 : i32
    return %c0_i32, %c0_i32_0, %c0_i32_1 : i32, i32, i32
  }
  func.func @transform_2(%arg0: i32) -> (i32, i32) {
    %c0_i32 = arith.constant 0 : i32
    %c0_i32_0 = arith.constant 0 : i32
    %c0_i32_1 = arith.constant 0 : i32
    return %c0_i32, %c0_i32_0 : i32, i32
  }
  func.func @transform_3(%arg0: i32) -> (i32, i32) {
    %c0_i32 = arith.constant 0 : i32
    %c0_i32_0 = arith.constant 0 : i32
    %c0_i32_1 = arith.constant 0 : i32
    return %c0_i32, %c0_i32_0 : i32, i32
  }
  func.func @transform_4(%arg0: i32) -> (i32, i32) {
    %c0_i32 = arith.constant 0 : i32
    %c0_i32_0 = arith.constant 0 : i32
    %c0_i32_1 = arith.constant 0 : i32
    return %c0_i32, %c0_i32_0 : i32, i32
  }
  func.func @transform_5(%arg0: i32) -> (i32, i32, i32) {
    %c0_i32 = arith.constant 0 : i32
    %c0_i32_0 = arith.constant 0 : i32
    %c0_i32_1 = arith.constant 0 : i32
    return %arg0, %c0_i32, %c0_i32_0 : i32, i32, i32
  }
}

</mosaic_0001>

<llo_original>
// kernel: mvtec_forward.1
$region0: #{mvtec_forward.1}
  #allocation0 [shape = 'u32[]', space=smem, size = 0x4, offset = 0x4, fixed_abs, tag = 'smem constant byte address 0x4 - core index']
  #allocation1 [shape = 'u32[72,128]{1,0:T(1,128)}', space=vmem, size = 0x9000, scoped, tag = 'internal scratch']
  %s0 = inlined_call_operand.vmem [shape: bf16[2,18,72], index: 0, kind: input, shape index: {}]
  %s1 = inlined_call_operand.vmem [shape: bf16[3,72,512], index: 1, kind: input, shape index: {}]
  %s2 = inlined_call_operand.vmem [shape: f32[1,512], index: 2, kind: input, shape index: {}]
  %s3 = inlined_call_operand.vmem [shape: f32[512,128], index: 3, kind: input, shape index: {}]
  %s4 = inlined_call_operand.vmem [shape: f32[1,128], index: 4, kind: input, shape index: {}]
  %s5 = inlined_call_operand.hbm [shape: f32[2,1,128], index: 5, kind: output, shape index: {}]
  %s6 = sld [smem:[#allocation0]]
  $region53: #{mvtec_forward.1} parent=0
    _
  %s8 = ssub.s32 1, %s6
  %s9 = scalar_select 0, %s8, %s6
  $region1: #{mvtec_forward.1} parent=0
    #allocation2 [shape = 'u8[1024]{0}', space=vmem, size = 0x400, scoped, tag = 'output window, operand 0']
    #allocation3 [shape = 's32[2]{0}', space=sflag, size = 0x8, scoped, tag = 'scoped memory for mvtec_forward.1']
    %10 = vsyncpa [#allocation3], 0
    %s11 = scalar_lea.sflag [#allocation3], 1
    %12 = vsyncpa %s11, 0
    loop: start=0, step=1, limit=4
    $region2: #{mvtec_forward.1} parent=1 // loop_pre_header
      _
    $region3: #{mvtec_forward.1} parent=1 // loop_header
      %s14 = sphi 0, %s18
      %p15 = scmp.ge.s32.totalorder %s14, 4
      %s24 = sphi 0, %s26
      %s27 = sphi 0, %s24
      %s28 = sphi 0, %s27
      %s44 = sphi 0, %s28
      %s48 = sphi 0, %s48
      %s50 = sphi 0, %s48
      %s51 = sphi 0, %s50
      %s65 = sphi 0, %s51
      %s69 = sphi 0, %s69
      %s71 = sphi 0, %s69
      %s72 = sphi 0, %s71
      %s86 = sphi 0, %s72
      %s90 = sphi 0, %s90
      %s92 = sphi 0, %s90
      %s93 = sphi 0, %s92
      %s107 = sphi 0, %s93
      %s111 = sphi 0, %s111
      %s113 = sphi 0, %s111
      %s114 = sphi 0, %s113
      %s128 = sphi 0, %s114
      %s134 = sphi 0, %s136
      %s137 = sphi 0, %s134
      %s138 = sphi 0, %s137
      %s154 = sphi 0, %s138
    $region4: #{mvtec_forward.1} parent=1 // loop_header_branch
      %17 = sbr.rel (%p15) target = $region8
    $region5: #{mvtec_forward.1} parent=1 // loop_body
      %s19 = ssub.s32 %s14, 1
      %s20 = ssub.s32 %s14, 2
      %s21 = sadd.s32 %s14, 1
      %s22 = ssub.s32 %s14, %s21
      %p23 = scmp.eq.s32.totalorder %s22, 0
      %s25 = sadd.s32 %s24, 1
      %s26 = scalar_select %p23, %s24, %s25
      %p29 = pneg %p23
      %p30 = scmp.eq.s32.totalorder %s14, 1
      %p31 = por %p29, %p30
      %p32 = scmp.ne.s32.totalorder %s24, %s27
      %p33 = scmp.eq.s32.totalorder %s14, 0
      %p34 = por %p32, %p33
      %p35 = scmp.ne.s32.totalorder %s24, %s27
      %p36 = scmp.eq.s32.totalorder %s19, 1
      %p37 = por %p35, %p36
      %p38 = scmp.ne.s32.totalorder %s27, %s28
      %p39 = scmp.eq.s32.totalorder %s19, 0
      %p40 = por %p38, %p39
      %p41 = scmp.ne.s32.totalorder %s27, %s28
      %p42 = scmp.eq.s32.totalorder %s20, 1
      %p43 = por %p41, %p42
      %p45 = scmp.ne.s32.totalorder %s28, %s44
      %p46 = scmp.eq.s32.totalorder %s20, 0
      %p47 = por %p45, %p46
      %s49 = sadd.s32 %s48, 1
      %p52 = scmp.eq.s32.totalorder %s14, 1
      %p53 = scmp.ne.s32.totalorder %s48, %s50
      %p54 = scmp.eq.s32.totalorder %s14, 0
      %p55 = por %p53, %p54
      %p56 = scmp.ne.s32.totalorder %s48, %s50
      %p57 = scmp.eq.s32.totalorder %s19, 1
      %p58 = por %p56, %p57
      %p59 = scmp.ne.s32.totalorder %s50, %s51
      %p60 = scmp.eq.s32.totalorder %s19, 0
      %p61 = por %p59, %p60
      %p62 = scmp.ne.s32.totalorder %s50, %s51
      %p63 = scmp.eq.s32.totalorder %s20, 1
      %p64 = por %p62, %p63
      %p66 = scmp.ne.s32.totalorder %s51, %s65
      %p67 = scmp.eq.s32.totalorder %s20, 0
      %p68 = por %p66, %p67
      %s70 = sadd.s32 %s69, 1
      %p73 = scmp.eq.s32.totalorder %s14, 1
      %p74 = scmp.ne.s32.totalorder %s69, %s71
      %p75 = scmp.eq.s32.totalorder %s14, 0
      %p76 = por %p74, %p75
      %p77 = scmp.ne.s32.totalorder %s69, %s71
      %p78 = scmp.eq.s32.totalorder %s19, 1
      %p79 = por %p77, %p78
      %p80 = scmp.ne.s32.totalorder %s71, %s72
      %p81 = scmp.eq.s32.totalorder %s19, 0
      %p82 = por %p80, %p81
      %p83 = scmp.ne.s32.totalorder %s71, %s72
      %p84 = scmp.eq.s32.totalorder %s20, 1
      %p85 = por %p83, %p84
      %p87 = scmp.ne.s32.totalorder %s72, %s86
      %p88 = scmp.eq.s32.totalorder %s20, 0
      %p89 = por %p87, %p88
      %s91 = sadd.s32 %s90, 1
      %p94 = scmp.eq.s32.totalorder %s14, 1
      %p95 = scmp.ne.s32.totalorder %s90, %s92
      %p96 = scmp.eq.s32.totalorder %s14, 0
      %p97 = por %p95, %p96
      %p98 = scmp.ne.s32.totalorder %s90, %s92
      %p99 = scmp.eq.s32.totalorder %s19, 1
      %p100 = por %p98, %p99
      %p101 = scmp.ne.s32.totalorder %s92, %s93
      %p102 = scmp.eq.s32.totalorder %s19, 0
      %p103 = por %p101, %p102
      %p104 = scmp.ne.s32.totalorder %s92, %s93
      %p105 = scmp.eq.s32.totalorder %s20, 1
      %p106 = por %p104, %p105
      %p108 = scmp.ne.s32.totalorder %s93, %s107
      %p109 = scmp.eq.s32.totalorder %s20, 0
      %p110 = por %p108, %p109
      %s112 = sadd.s32 %s111, 1
      %p115 = scmp.eq.s32.totalorder %s14, 1
      %p116 = scmp.ne.s32.totalorder %s111, %s113
      %p117 = scmp.eq.s32.totalorder %s14, 0
      %p118 = por %p116, %p117
      %p119 = scmp.ne.s32.totalorder %s111, %s113
      %p120 = scmp.eq.s32.totalorder %s19, 1
      %p121 = por %p119, %p120
      %p122 = scmp.ne.s32.totalorder %s113, %s114
      %p123 = scmp.eq.s32.totalorder %s19, 0
      %p124 = por %p122, %p123
      %p125 = scmp.ne.s32.totalorder %s113, %s114
      %p126 = scmp.eq.s32.totalorder %s20, 1
      %p127 = por %p125, %p126
      %p129 = scmp.ne.s32.totalorder %s114, %s128
      %p130 = scmp.eq.s32.totalorder %s20, 0
      %p131 = por %p129, %p130
      %s132 = ssub.s32 %s14, %s21
      %p133 = scmp.eq.s32.totalorder %s132, 0
      %s135 = sadd.s32 %s134, 1
      %s136 = scalar_select %p133, %s134, %s135
      %p139 = pneg %p133
      %p140 = scmp.eq.s32.totalorder %s14, 1
      %p141 = por %p139, %p140
      %p142 = scmp.ne.s32.totalorder %s134, %s137
      %p143 = scmp.eq.s32.totalorder %s14, 0
      %p144 = por %p142, %p143
      %p145 = scmp.ne.s32.totalorder %s134, %s137
      %p146 = scmp.eq.s32.totalorder %s19, 1
      %p147 = por %p145, %p146
      %p148 = scmp.ne.s32.totalorder %s137, %s138
      %p149 = scmp.eq.s32.totalorder %s19, 0
      %p150 = por %p148, %p149
      %p151 = scmp.ne.s32.totalorder %s137, %s138
      %p152 = scmp.eq.s32.totalorder %s20, 1
      %p153 = por %p151, %p152
      %p155 = scmp.ne.s32.totalorder %s138, %s154
      %p156 = scmp.eq.s32.totalorder %s20, 0
      %p157 = por %p155, %p156
      %p158 = scmp.le.s32.totalorder 1, %s14
      %p159 = scmp.lt.s32.totalorder %s14, 3
      %p160 = pnand %p158, %p159
      %p161 = pneg %p160
      // Predicated region
      $region9: #{mvtec_forward.1} parent=5 // pred_check
        _
      $region10: #{mvtec_forward.1} parent=5 // pred_check_branch
        %163 = sbr.rel (%p160) target = $region12
      $region11: #{mvtec_forward.1} parent=5 // pred_region
        %s164 = ssub.s32 %s14, 1
        // Predicated region
        $region13: #{mvtec_forward.1} parent=11 // pred_check
          %p165 = pneg %p61
        $region14: #{mvtec_forward.1} parent=11 // pred_check_branch
          %167 = sbr.rel (%p165) target = $region16
        $region15: #{mvtec_forward.1} parent=11 // pred_region
          _
        $region16: #{mvtec_forward.1} parent=11 // pred_fallthru
          _
        // Predicated region
        $region17: #{mvtec_forward.1} parent=11 // pred_check
          %p168 = pneg %p82
        $region18: #{mvtec_forward.1} parent=11 // pred_check_branch
          %170 = sbr.rel (%p168) target = $region20
        $region19: #{mvtec_forward.1} parent=11 // pred_region
          _
        $region20: #{mvtec_forward.1} parent=11 // pred_fallthru
          _
        // Predicated region
        $region21: #{mvtec_forward.1} parent=11 // pred_check
          %p171 = pneg %p103
        $region22: #{mvtec_forward.1} parent=11 // pred_check_branch
          %173 = sbr.rel (%p171) target = $region24
        $region23: #{mvtec_forward.1} parent=11 // pred_region
          _
        $region24: #{mvtec_forward.1} parent=11 // pred_fallthru
          _
        // Predicated region
        $region25: #{mvtec_forward.1} parent=11 // pred_check
          %p174 = pneg %p124
        $region26: #{mvtec_forward.1} parent=11 // pred_check_branch
          %176 = sbr.rel (%p174) target = $region28
        $region27: #{mvtec_forward.1} parent=11 // pred_region
          _
        $region28: #{mvtec_forward.1} parent=11 // pred_fallthru
          _
      $region12: #{mvtec_forward.1} parent=5 // pred_fallthru
        _
      %p177 = scmp.lt.s32.totalorder %s14, 2
      // Predicated region
      $region29: #{mvtec_forward.1} parent=5 // pred_check
        %p178 = pneg %p177
      $region30: #{mvtec_forward.1} parent=5 // pred_check_branch
        %180 = sbr.rel (%p178) target = $region32
      $region31: #{mvtec_forward.1} parent=5 // pred_region
        // Predicated region
        $region33: #{mvtec_forward.1} parent=31 // pred_check
          %p181 = pneg %p34
        $region34: #{mvtec_forward.1} parent=31 // pred_check_branch
          %183 = sbr.rel (%p181) target = $region36
        $region35: #{mvtec_forward.1} parent=31 // pred_region
          %p184 = scmp.lt.s32.totalorder %s14, 1
          %s185 = scalar_select %p184, %s14, 1
          %s186 = smul.addr %s185, 3
          %s187 = smul.addr %s186, 4
          %s188 = scalar_lea.vmem %s0, %s187
        $region36: #{mvtec_forward.1} parent=31 // pred_fallthru
          _
      $region32: #{mvtec_forward.1} parent=5 // pred_fallthru
        _
      %p189 = scmp.le.s32.totalorder 1, %s14
      %p190 = scmp.lt.s32.totalorder %s14, 3
      %p191 = pnand %p189, %p190
      %p192 = pneg %p191
      // Predicated region
      $region37: #{mvtec_forward.1} parent=5 // pred_check
        _
      $region38: #{mvtec_forward.1} parent=5 // pred_check_branch
        %194 = sbr.rel (%p191) target = $region40
      $region39: #{mvtec_forward.1} parent=5 // pred_region
        %s195 = ssub.s32 %s14, 1
        %p196 = scmp.lt.s32.totalorder %s19, 1
        %s197 = scalar_select %p196, %s19, 1
        %s198 = smul.addr %s197, 3
        %s199 = smul.addr %s198, 4
        %s200 = scalar_lea.vmem %s0, %s199
        %p201 = pneg %p40
        %p202 = pneg %p37
        %p203 = pneg %p61
        %p204 = pneg %p58
        %p205 = pneg %p82
        %p206 = pneg %p79
        %p207 = pneg %p103
        %p208 = pneg %p100
        %p209 = pneg %p124
        %p210 = pneg %p121
        %p211 = pneg %p150
        %p212 = pneg %p147
        %s213 = sand.u32 %s137, 1
        %s214 = scalar_lea.sflag [#allocation3], %s213
        %s215 = sand.u32 %s137, 1
        %s216 = scalar_lea.vmem [#allocation2], %s215
        %p217 = scmp.lt.s32.totalorder %s19, 1
        %s218 = scalar_select %p217, %s19, 1
        %s219 = smul.addr %s218, 3
        %s220 = smul.addr %s219, 4
        %s221 = scalar_lea.vmem %s0, %s220
        %v223 = vld [vmem:[%s221] sm:$0xf]
        %v224 = vld [vmem:[%s221 + $0x4] sm:$0xf]
        %v225 = vld [vmem:[%s221 + $0x8] sm:$0x1]
        %v226 = vld [vmem:[%s1] sm:$0xff]
        %v227 = vld [vmem:[%s1 + $0x8] sm:$0xff]
        %v228 = vld [vmem:[%s1 + $0x10] sm:$0xff]
        %v229 = vld [vmem:[%s1 + $0x18] sm:$0xff]
        %v230 = vld [vmem:[%s1 + $0x20] sm:$0xff]
        %v231 = vld [vmem:[%s1 + $0x28] sm:$0xff]
        %v232 = vld [vmem:[%s1 + $0x30] sm:$0xff]
        %v233 = vld [vmem:[%s1 + $0x38] sm:$0xff]
        %v234 = vld [vmem:[%s1 + $0x40] sm:$0xff]
        %v235 = vld [vmem:[%s1 + $0x48] sm:$0xff]
        %v236 = vld [vmem:[%s1 + $0x50] sm:$0xff]
        %v237 = vld [vmem:[%s1 + $0x58] sm:$0xff]
        %v238 = vld [vmem:[%s1 + $0x60] sm:$0xff]
        %v239 = vld [vmem:[%s1 + $0x68] sm:$0xff]
        %v240 = vld [vmem:[%s1 + $0x70] sm:$0xff]
        %v241 = vld [vmem:[%s1 + $0x78] sm:$0xff]
        %v242 = vld [vmem:[%s1 + $0x80] sm:$0xff]
        %v243 = vld [vmem:[%s1 + $0x88] sm:$0xff]
        %s244 = scalar_lea.vmem %s1, 144
        %v245 = vld [vmem:[%s244] sm:$0xff]
        %v246 = vld [vmem:[%s244 + $0x8] sm:$0xff]
        %v247 = vld [vmem:[%s244 + $0x10] sm:$0xff]
        %v248 = vld [vmem:[%s244 + $0x18] sm:$0xff]
        %v249 = vld [vmem:[%s244 + $0x20] sm:$0xff]
        %v250 = vld [vmem:[%s244 + $0x28] sm:$0xff]
        %v251 = vld [vmem:[%s244 + $0x30] sm:$0xff]
        %v252 = vld [vmem:[%s244 + $0x38] sm:$0xff]
        %v253 = vld [vmem:[%s244 + $0x40] sm:$0xff]
        %v254 = vld [vmem:[%s244 + $0x48] sm:$0xff]
        %v255 = vld [vmem:[%s244 + $0x50] sm:$0xff]
        %v256 = vld [vmem:[%s244 + $0x58] sm:$0xff]
        %v257 = vld [vmem:[%s244 + $0x60] sm:$0xff]
        %v258 = vld [vmem:[%s244 + $0x68] sm:$0xff]
        %v259 = vld [vmem:[%s244 + $0x70] sm:$0xff]
        %v260 = vld [vmem:[%s244 + $0x78] sm:$0xff]
        %v261 = vld [vmem:[%s244 + $0x80] sm:$0xff]
        %v262 = vld [vmem:[%s244 + $0x88] sm:$0xff]
        %v266 = vunpack.c.l.b16 %v223
        %v267 = vunpack.c.l.b16 %v224
        %v268 = vunpack.c.l.b16 %v225
        %v269 = vpack.c.b16 %v267, %v266
        %v270 = vpack.c.b16 %v268, %v268
        %vm271 = vsmask.f32 7424
        %v273 = vshrl.u32 %v269, 16
        %v275 = vshll.u32 %v269, 16
        %v277 = vrot.slane %v275, 1
        %v278 = vor.u32 %v273, %v277
        %v280 = vshll.u32 %v270, 16
        %v282 = vrot.slane %v280, 1
        %v283 = vsel %vm271, %v278, %v282
        %v302 = vunpack.c.l.b16 %v245
        %v303 = vunpack.c.h.b16 %v245
        %v304 = vunpack.c.l.b16 %v246
        %v305 = vunpack.c.h.b16 %v246
        %v306 = vunpack.c.l.b16 %v247
        %v307 = vunpack.c.h.b16 %v247
        %v308 = vunpack.c.l.b16 %v248
        %v309 = vunpack.c.h.b16 %v248
        %v310 = vunpack.c.l.b16 %v249
        %v311 = vunpack.c.h.b16 %v249
        %v312 = vunpack.c.l.b16 %v250
        %v313 = vunpack.c.h.b16 %v250
        %v314 = vunpack.c.l.b16 %v251
        %v315 = vunpack.c.h.b16 %v251
        %v316 = vunpack.c.l.b16 %v252
        %v317 = vunpack.c.h.b16 %v252
        %v318 = vunpack.c.l.b16 %v253
        %v319 = vunpack.c.h.b16 %v253
        %v320 = vunpack.c.l.b16 %v254
        %v321 = vunpack.c.h.b16 %v254
        %v322 = vunpack.c.l.b16 %v255
        %v323 = vunpack.c.h.b16 %v255
        %v324 = vunpack.c.l.b16 %v256
        %v325 = vunpack.c.h.b16 %v256
        %v326 = vunpack.c.l.b16 %v257
        %v327 = vunpack.c.h.b16 %v257
        %v328 = vunpack.c.l.b16 %v258
        %v329 = vunpack.c.h.b16 %v258
        %v330 = vunpack.c.l.b16 %v259
        %v331 = vunpack.c.h.b16 %v259
        %v332 = vunpack.c.l.b16 %v260
        %v333 = vunpack.c.h.b16 %v260
        %v334 = vunpack.c.l.b16 %v261
        %v335 = vunpack.c.h.b16 %v261
        %v336 = vunpack.c.l.b16 %v262
        %v337 = vunpack.c.h.b16 %v262
        %v338 = vpack.c.b16 %v306, %v302
        %v339 = vpack.c.b16 %v307, %v303
        %v340 = vpack.c.b16 %v308, %v304
        %v341 = vpack.c.b16 %v309, %v305
        %v342 = vpack.c.b16 %v314, %v310
        %v343 = vpack.c.b16 %v315, %v311
        %v344 = vpack.c.b16 %v316, %v312
        %v345 = vpack.c.b16 %v317, %v313
        %v346 = vpack.c.b16 %v322, %v318
        %v347 = vpack.c.b16 %v323, %v319
        %v348 = vpack.c.b16 %v324, %v320
        %v349 = vpack.c.b16 %v325, %v321
        %v350 = vpack.c.b16 %v330, %v326
        %v351 = vpack.c.b16 %v331, %v327
        %v352 = vpack.c.b16 %v332, %v328
        %v353 = vpack.c.b16 %v333, %v329
        %v354 = vpack.c.b16 %v334, %v334
        %v355 = vpack.c.b16 %v335, %v335
        %v356 = vpack.c.b16 %v336, %v336
        %v357 = vpack.c.b16 %v337, %v337
        %vm374 = vcmask 588800
        %v376 = vsel %vm374, %v283, 0
        %vm378 = vcmask 1043456
        %v380 = vsel %vm378, %v354, 0
        %v383 = vsel %vm378, %v355, 0
        %v386 = vsel %vm378, %v356, 0
        %v389 = vsel %vm378, %v357, 0
        %391 = vmatpush.bf16.msra.mxu0 0
        %392 = vmatpush.bf16.msra.mxu0 0
        %393 = vmatpush.bf16.msra.mxu0 0
        %394 = vmatpush.bf16.msra.mxu0 %v380
        %395 = vmatpush.bf16.msra.mxu0 %v350
        %396 = vmatpush.bf16.msra.mxu0 %v346
        %397 = vmatpush.bf16.msra.mxu0 %v342
        %398 = vmatpush.bf16.msra.mxu0 %v338
        %399 = vmatmul.bf16.gmra.mxu0 %v376
        %v400 = vpop.f32.mrf.mxu0
        %v401 = vadd.f32 0.0, %v400
        %v402 = vpop.f32.mrf.mxu0
        %v403 = vadd.f32 0.0, %v402
        %404 = vdwg.mxu0
        %405 = vmatpush.bf16.msra.mxu0 0
        %406 = vmatpush.bf16.msra.mxu0 0
        %407 = vmatpush.bf16.msra.mxu0 0
        %408 = vmatpush.bf16.msra.mxu0 %v383
        %409 = vmatpush.bf16.msra.mxu0 %v351
        %410 = vmatpush.bf16.msra.mxu0 %v347
        %411 = vmatpush.bf16.msra.mxu0 %v343
        %412 = vmatpush.bf16.msra.mxu0 %v339
        %413 = vmatmul.bf16.gmra.mxu0 %v376
        %v414 = vpop.f32.mrf.mxu0
        %v415 = vadd.f32 0.0, %v414
        %v416 = vpop.f32.mrf.mxu0
        %v417 = vadd.f32 0.0, %v416
        %418 = vdwg.mxu0
        %419 = vmatpush.bf16.msra.mxu0 0
        %420 = vmatpush.bf16.msra.mxu0 0
        %421 = vmatpush.bf16.msra.mxu0 0
        %422 = vmatpush.bf16.msra.mxu0 %v386
        %423 = vmatpush.bf16.msra.mxu0 %v352
        %424 = vmatpush.bf16.msra.mxu0 %v348
        %425 = vmatpush.bf16.msra.mxu0 %v344
        %426 = vmatpush.bf16.msra.mxu0 %v340
        %427 = vmatmul.bf16.gmra.mxu0 %v376
        %v428 = vpop.f32.mrf.mxu0
        %v429 = vadd.f32 0.0, %v428
        %v430 = vpop.f32.mrf.mxu0
        %v431 = vadd.f32 0.0, %v430
        %432 = vdwg.mxu0
        %433 = vmatpush.bf16.msra.mxu0 0
        %434 = vmatpush.bf16.msra.mxu0 0
        %435 = vmatpush.bf16.msra.mxu0 0
        %436 = vmatpush.bf16.msra.mxu0 %v389
        %437 = vmatpush.bf16.msra.mxu0 %v353
        %438 = vmatpush.bf16.msra.mxu0 %v349
        %439 = vmatpush.bf16.msra.mxu0 %v345
        %440 = vmatpush.bf16.msra.mxu0 %v341
        %441 = vmatmul.bf16.gmra.mxu0 %v376
        %v442 = vpop.f32.mrf.mxu0
        %v443 = vadd.f32 0.0, %v442
        %v444 = vpop.f32.mrf.mxu0
        %v445 = vadd.f32 0.0, %v444
        %446 = vdwg.mxu0
        %v465 = vunpack.c.l.b16 %v226
        %v466 = vunpack.c.h.b16 %v226
        %v467 = vunpack.c.l.b16 %v227
        %v468 = vunpack.c.h.b16 %v227
        %v469 = vunpack.c.l.b16 %v228
        %v470 = vunpack.c.h.b16 %v228
        %v471 = vunpack.c.l.b16 %v229
        %v472 = vunpack.c.h.b16 %v229
        %v473 = vunpack.c.l.b16 %v230
        %v474 = vunpack.c.h.b16 %v230
        %v475 = vunpack.c.l.b16 %v231
        %v476 = vunpack.c.h.b16 %v231
        %v477 = vunpack.c.l.b16 %v232
        %v478 = vunpack.c.h.b16 %v232
        %v479 = vunpack.c.l.b16 %v233
        %v480 = vunpack.c.h.b16 %v233
        %v481 = vunpack.c.l.b16 %v234
        %v482 = vunpack.c.h.b16 %v234
        %v483 = vunpack.c.l.b16 %v235
        %v484 = vunpack.c.h.b16 %v235
        %v485 = vunpack.c.l.b16 %v236
        %v486 = vunpack.c.h.b16 %v236
        %v487 = vunpack.c.l.b16 %v237
        %v488 = vunpack.c.h.b16 %v237
        %v489 = vunpack.c.l.b16 %v238
        %v490 = vunpack.c.h.b16 %v238
        %v491 = vunpack.c.l.b16 %v239
        %v492 = vunpack.c.h.b16 %v239
        %v493 = vunpack.c.l.b16 %v240
        %v494 = vunpack.c.h.b16 %v240
        %v495 = vunpack.c.l.b16 %v241
        %v496 = vunpack.c.h.b16 %v241
        %v497 = vunpack.c.l.b16 %v242
        %v498 = vunpack.c.h.b16 %v242
        %v499 = vunpack.c.l.b16 %v243
        %v500 = vunpack.c.h.b16 %v243
        %v501 = vpack.c.b16 %v469, %v465
        %v502 = vpack.c.b16 %v470, %v466
        %v503 = vpack.c.b16 %v471, %v467
        %v504 = vpack.c.b16 %v472, %v468
        %v505 = vpack.c.b16 %v477, %v473
        %v506 = vpack.c.b16 %v478, %v474
        %v507 = vpack.c.b16 %v479, %v475
        %v508 = vpack.c.b16 %v480, %v476
        %v509 = vpack.c.b16 %v485, %v481
        %v510 = vpack.c.b16 %v486, %v482
        %v511 = vpack.c.b16 %v487, %v483
        %v512 = vpack.c.b16 %v488, %v484
        %v513 = vpack.c.b16 %v493, %v489
        %v514 = vpack.c.b16 %v494, %v490
        %v515 = vpack.c.b16 %v495, %v491
        %v516 = vpack.c.b16 %v496, %v492
        %v517 = vpack.c.b16 %v497, %v497
        %v518 = vpack.c.b16 %v498, %v498
        %v519 = vpack.c.b16 %v499, %v499
        %v520 = vpack.c.b16 %v500, %v500
        %v537 = vsel %vm374, %v269, 0
        %v540 = vsel %vm378, %v517, 0
        %v543 = vsel %vm378, %v518, 0
        %v546 = vsel %vm378, %v519, 0
        %v549 = vsel %vm378, %v520, 0
        %551 = vmatpush.bf16.msra.mxu0 0
        %552 = vmatpush.bf16.msra.mxu0 0
        %553 = vmatpush.bf16.msra.mxu0 0
        %554 = vmatpush.bf16.msra.mxu0 %v540
        %555 = vmatpush.bf16.msra.mxu0 %v513
        %556 = vmatpush.bf16.msra.mxu0 %v509
        %557 = vmatpush.bf16.msra.mxu0 %v505
        %558 = vmatpush.bf16.msra.mxu0 %v501
        %559 = vmatmul.bf16.gmra.mxu0 %v537
        %v560 = vpop.f32.mrf.mxu0
        %v561 = vadd.f32 %v401, %v560
        %v562 = vpop.f32.mrf.mxu0
        %v563 = vadd.f32 %v403, %v562
        %564 = vdwg.mxu0
        %565 = vmatpush.bf16.msra.mxu0 0
        %566 = vmatpush.bf16.msra.mxu0 0
        %567 = vmatpush.bf16.msra.mxu0 0
        %568 = vmatpush.bf16.msra.mxu0 %v543
        %569 = vmatpush.bf16.msra.mxu0 %v514
        %570 = vmatpush.bf16.msra.mxu0 %v510
        %571 = vmatpush.bf16.msra.mxu0 %v506
        %572 = vmatpush.bf16.msra.mxu0 %v502
        %573 = vmatmul.bf16.gmra.mxu0 %v537
        %v574 = vpop.f32.mrf.mxu0
        %v575 = vadd.f32 %v415, %v574
        %v576 = vpop.f32.mrf.mxu0
        %v577 = vadd.f32 %v417, %v576
        %578 = vdwg.mxu0
        %579 = vmatpush.bf16.msra.mxu0 0
        %580 = vmatpush.bf16.msra.mxu0 0
        %581 = vmatpush.bf16.msra.mxu0 0
        %582 = vmatpush.bf16.msra.mxu0 %v546
        %583 = vmatpush.bf16.msra.mxu0 %v515
        %584 = vmatpush.bf16.msra.mxu0 %v511
        %585 = vmatpush.bf16.msra.mxu0 %v507
        %586 = vmatpush.bf16.msra.mxu0 %v503
        %587 = vmatmul.bf16.gmra.mxu0 %v537
        %v588 = vpop.f32.mrf.mxu0
        %v589 = vadd.f32 %v429, %v588
        %v590 = vpop.f32.mrf.mxu0
        %v591 = vadd.f32 %v431, %v590
        %592 = vdwg.mxu0
        %593 = vmatpush.bf16.msra.mxu0 0
        %594 = vmatpush.bf16.msra.mxu0 0
        %595 = vmatpush.bf16.msra.mxu0 0
        %596 = vmatpush.bf16.msra.mxu0 %v549
        %597 = vmatpush.bf16.msra.mxu0 %v516
        %598 = vmatpush.bf16.msra.mxu0 %v512
        %599 = vmatpush.bf16.msra.mxu0 %v508
        %600 = vmatpush.bf16.msra.mxu0 %v504
        %601 = vmatmul.bf16.gmra.mxu0 %v537
        %v602 = vpop.f32.mrf.mxu0
        %v603 = vadd.f32 %v443, %v602
        %v604 = vpop.f32.mrf.mxu0
        %v605 = vadd.f32 %v445, %v604
        %606 = vdwg.mxu0
        %s607 = scalar_lea.vmem %s1, 288
        %v608 = vld [vmem:[%s607] sm:$0xff]
        %v609 = vld [vmem:[%s607 + $0x8] sm:$0xff]
        %v610 = vld [vmem:[%s607 + $0x10] sm:$0xff]
        %v611 = vld [vmem:[%s607 + $0x18] sm:$0xff]
        %v612 = vld [vmem:[%s607 + $0x20] sm:$0xff]
        %v613 = vld [vmem:[%s607 + $0x28] sm:$0xff]
        %v614 = vld [vmem:[%s607 + $0x30] sm:$0xff]
        %v615 = vld [vmem:[%s607 + $0x38] sm:$0xff]
        %v616 = vld [vmem:[%s607 + $0x40] sm:$0xff]
        %v617 = vld [vmem:[%s607 + $0x48] sm:$0xff]
        %v618 = vld [vmem:[%s607 + $0x50] sm:$0xff]
        %v619 = vld [vmem:[%s607 + $0x58] sm:$0xff]
        %v620 = vld [vmem:[%s607 + $0x60] sm:$0xff]
        %v621 = vld [vmem:[%s607 + $0x68] sm:$0xff]
        %v622 = vld [vmem:[%s607 + $0x70] sm:$0xff]
        %v623 = vld [vmem:[%s607 + $0x78] sm:$0xff]
        %v624 = vld [vmem:[%s607 + $0x80] sm:$0xff]
        %v625 = vld [vmem:[%s607 + $0x88] sm:$0xff]
        %vm626 = vcmask 1046528
        %v627 = vrot.slane %v269, 1
        %v628 = vrot.slane %v270, 1
        %v629 = vsel %vm626, %v627, %v628
        %v648 = vunpack.c.l.b16 %v608
        %v649 = vunpack.c.h.b16 %v608
        %v650 = vunpack.c.l.b16 %v609
        %v651 = vunpack.c.h.b16 %v609
        %v652 = vunpack.c.l.b16 %v610
        %v653 = vunpack.c.h.b16 %v610
        %v654 = vunpack.c.l.b16 %v611
        %v655 = vunpack.c.h.b16 %v611
        %v656 = vunpack.c.l.b16 %v612
        %v657 = vunpack.c.h.b16 %v612
        %v658 = vunpack.c.l.b16 %v613
        %v659 = vunpack.c.h.b16 %v613
        %v660 = vunpack.c.l.b16 %v614
        %v661 = vunpack.c.h.b16 %v614
        %v662 = vunpack.c.l.b16 %v615
        %v663 = vunpack.c.h.b16 %v615
        %v664 = vunpack.c.l.b16 %v616
        %v665 = vunpack.c.h.b16 %v616
        %v666 = vunpack.c.l.b16 %v617
        %v667 = vunpack.c.h.b16 %v617
        %v668 = vunpack.c.l.b16 %v618
        %v669 = vunpack.c.h.b16 %v618
        %v670 = vunpack.c.l.b16 %v619
        %v671 = vunpack.c.h.b16 %v619
        %v672 = vunpack.c.l.b16 %v620
        %v673 = vunpack.c.h.b16 %v620
        %v674 = vunpack.c.l.b16 %v621
        %v675 = vunpack.c.h.b16 %v621
        %v676 = vunpack.c.l.b16 %v622
        %v677 = vunpack.c.h.b16 %v622
        %v678 = vunpack.c.l.b16 %v623
        %v679 = vunpack.c.h.b16 %v623
        %v680 = vunpack.c.l.b16 %v624
        %v681 = vunpack.c.h.b16 %v624
        %v682 = vunpack.c.l.b16 %v625
        %v683 = vunpack.c.h.b16 %v625
        %v684 = vpack.c.b16 %v652, %v648
        %v685 = vpack.c.b16 %v653, %v649
        %v686 = vpack.c.b16 %v654, %v650
        %v687 = vpack.c.b16 %v655, %v651
        %v688 = vpack.c.b16 %v660, %v656
        %v689 = vpack.c.b16 %v661, %v657
        %v690 = vpack.c.b16 %v662, %v658
        %v691 = vpack.c.b16 %v663, %v659
        %v692 = vpack.c.b16 %v668, %v664
        %v693 = vpack.c.b16 %v669, %v665
        %v694 = vpack.c.b16 %v670, %v666
        %v695 = vpack.c.b16 %v671, %v667
        %v696 = vpack.c.b16 %v676, %v672
        %v697 = vpack.c.b16 %v677, %v673
        %v698 = vpack.c.b16 %v678, %v674
        %v699 = vpack.c.b16 %v679, %v675
        %v700 = vpack.c.b16 %v680, %v680
        %v701 = vpack.c.b16 %v681, %v681
        %v702 = vpack.c.b16 %v682, %v682
        %v703 = vpack.c.b16 %v683, %v683
        %v721 = vsel %vm374, %v629, 0
        %v724 = vsel %vm378, %v700, 0
        %v727 = vsel %vm378, %v701, 0
        %v730 = vsel %vm378, %v702, 0
        %v733 = vsel %vm378, %v703, 0
        %735 = vmatpush.bf16.msra.mxu0 0
        %736 = vmatpush.bf16.msra.mxu0 0
        %737 = vmatpush.bf16.msra.mxu0 0
        %738 = vmatpush.bf16.msra.mxu0 %v724
        %739 = vmatpush.bf16.msra.mxu0 %v696
        %740 = vmatpush.bf16.msra.mxu0 %v692
        %741 = vmatpush.bf16.msra.mxu0 %v688
        %742 = vmatpush.bf16.msra.mxu0 %v684
        %743 = vmatmul.bf16.gmra.mxu0 %v721
        %v744 = vpop.f32.mrf.mxu0
        %v745 = vadd.f32 0.0, %v744
        %v746 = vpop.f32.mrf.mxu0
        %v747 = vadd.f32 0.0, %v746
        %748 = vdwg.mxu0
        %749 = vmatpush.bf16.msra.mxu0 0
        %750 = vmatpush.bf16.msra.mxu0 0
        %751 = vmatpush.bf16.msra.mxu0 0
        %752 = vmatpush.bf16.msra.mxu0 %v727
        %753 = vmatpush.bf16.msra.mxu0 %v697
        %754 = vmatpush.bf16.msra.mxu0 %v693
        %755 = vmatpush.bf16.msra.mxu0 %v689
        %756 = vmatpush.bf16.msra.mxu0 %v685
        %757 = vmatmul.bf16.gmra.mxu0 %v721
        %v758 = vpop.f32.mrf.mxu0
        %v759 = vadd.f32 0.0, %v758
        %v760 = vpop.f32.mrf.mxu0
        %v761 = vadd.f32 0.0, %v760
        %762 = vdwg.mxu0
        %763 = vmatpush.bf16.msra.mxu0 0
        %764 = vmatpush.bf16.msra.mxu0 0
        %765 = vmatpush.bf16.msra.mxu0 0
        %766 = vmatpush.bf16.msra.mxu0 %v730
        %767 = vmatpush.bf16.msra.mxu0 %v698
        %768 = vmatpush.bf16.msra.mxu0 %v694
        %769 = vmatpush.bf16.msra.mxu0 %v690
        %770 = vmatpush.bf16.msra.mxu0 %v686
        %771 = vmatmul.bf16.gmra.mxu0 %v721
        %v772 = vpop.f32.mrf.mxu0
        %v773 = vadd.f32 0.0, %v772
        %v774 = vpop.f32.mrf.mxu0
        %v775 = vadd.f32 0.0, %v774
        %776 = vdwg.mxu0
        %777 = vmatpush.bf16.msra.mxu0 0
        %778 = vmatpush.bf16.msra.mxu0 0
        %779 = vmatpush.bf16.msra.mxu0 0
        %780 = vmatpush.bf16.msra.mxu0 %v733
        %781 = vmatpush.bf16.msra.mxu0 %v699
        %782 = vmatpush.bf16.msra.mxu0 %v695
        %783 = vmatpush.bf16.msra.mxu0 %v691
        %784 = vmatpush.bf16.msra.mxu0 %v687
        %785 = vmatmul.bf16.gmra.mxu0 %v721
        %v786 = vpop.f32.mrf.mxu0
        %v787 = vadd.f32 0.0, %v786
        %v788 = vpop.f32.mrf.mxu0
        %v789 = vadd.f32 0.0, %v788
        %790 = vdwg.mxu0
        %v791 = vadd.f32 %v561, %v745
        %v792 = vadd.f32 %v575, %v759
        %v793 = vadd.f32 %v589, %v773
        %v794 = vadd.f32 %v603, %v787
        %v795 = vadd.f32 %v563, %v747
        %v796 = vadd.f32 %v577, %v761
        %v797 = vadd.f32 %v591, %v775
        %v798 = vadd.f32 %v605, %v789
        %v799 = vld [vmem:[%s2] sm:$0xf]
        %v801 = vperm.slane %v799, 0
        %v802 = vperm.slane %v799, 1
        %v803 = vperm.slane %v799, 2
        %v804 = vperm.slane %v799, 3
        %v809 = vadd.f32 %v791, %v801
        %v810 = vadd.f32 %v792, %v802
        %v811 = vadd.f32 %v793, %v803
        %v812 = vadd.f32 %v794, %v804
        %v813 = vadd.f32 %v795, %v801
        %v814 = vadd.f32 %v796, %v802
        %v815 = vadd.f32 %v797, %v803
        %v816 = vadd.f32 %v798, %v804
        %v817 = vmax.f32 %v809, 0.0
        %v818 = vmax.f32 %v810, 0.0
        %v819 = vmax.f32 %v811, 0.0
        %v820 = vmax.f32 %v812, 0.0
        %v821 = vmax.f32 %v813, 0.0
        %v822 = vmax.f32 %v814, 0.0
        %v823 = vmax.f32 %v815, 0.0
        %v824 = vmax.f32 %v816, 0.0
        %v825 = vadd.f32 %v817, %v821
        %v826 = vrot.slane %v825, 4
        %v827 = vadd.f32 %v825, %v826
        %v828 = vrot.slane %v827, 2
        %v829 = vadd.f32 %v827, %v828
        %v830 = vrot.slane %v829, 1
        %v831 = vadd.f32 %v829, %v830
        %v832 = vadd.f32 %v818, %v822
        %v833 = vrot.slane %v832, 4
        %v834 = vadd.f32 %v832, %v833
        %v835 = vrot.slane %v834, 2
        %v836 = vadd.f32 %v834, %v835
        %v837 = vrot.slane %v836, 1
        %v838 = vadd.f32 %v836, %v837
        %v839 = vadd.f32 %v819, %v823
        %v840 = vrot.slane %v839, 4
        %v841 = vadd.f32 %v839, %v840
        %v842 = vrot.slane %v841, 2
        %v843 = vadd.f32 %v841, %v842
        %v844 = vrot.slane %v843, 1
        %v845 = vadd.f32 %v843, %v844
        %v846 = vadd.f32 %v820, %v824
        %v847 = vrot.slane %v846, 4
        %v848 = vadd.f32 %v846, %v847
        %v849 = vrot.slane %v848, 2
        %v850 = vadd.f32 %v848, %v849
        %v851 = vrot.slane %v850, 1
        %v852 = vadd.f32 %v850, %v851
        %v853 = vmul.f32 %v831, 0.00390625
        %v854 = vmul.f32 %v838, 0.00390625
        %v855 = vmul.f32 %v845, 0.00390625
        %v856 = vmul.f32 %v852, 0.00390625
        %v857 = vld [vmem:[%s3] sm:$0xff]
        %v858 = vld [vmem:[%s3 + $0x8] sm:$0xff]
        %v859 = vld [vmem:[%s3 + $0x10] sm:$0xff]
        %v860 = vld [vmem:[%s3 + $0x18] sm:$0xff]
        %v861 = vld [vmem:[%s3 + $0x20] sm:$0xff]
        %v862 = vld [vmem:[%s3 + $0x28] sm:$0xff]
        %v863 = vld [vmem:[%s3 + $0x30] sm:$0xff]
        %v864 = vld [vmem:[%s3 + $0x38] sm:$0xff]
        %v865 = vld [vmem:[%s3 + $0x40] sm:$0xff]
        %v866 = vld [vmem:[%s3 + $0x48] sm:$0xff]
        %v867 = vld [vmem:[%s3 + $0x50] sm:$0xff]
        %v868 = vld [vmem:[%s3 + $0x58] sm:$0xff]
        %v869 = vld [vmem:[%s3 + $0x60] sm:$0xff]
        %v870 = vld [vmem:[%s3 + $0x68] sm:$0xff]
        %v871 = vld [vmem:[%s3 + $0x70] sm:$0xff]
        %v872 = vld [vmem:[%s3 + $0x78] sm:$0xff]
        %v873 = vld [vmem:[%s3 + $0x80] sm:$0xff]
        %v874 = vld [vmem:[%s3 + $0x88] sm:$0xff]
        %v875 = vld [vmem:[%s3 + $0x90] sm:$0xff]
        %v876 = vld [vmem:[%s3 + $0x98] sm:$0xff]
        %v877 = vld [vmem:[%s3 + $0xa0] sm:$0xff]
        %v878 = vld [vmem:[%s3 + $0xa8] sm:$0xff]
        %v879 = vld [vmem:[%s3 + $0xb0] sm:$0xff]
        %v880 = vld [vmem:[%s3 + $0xb8] sm:$0xff]
        %v881 = vld [vmem:[%s3 + $0xc0] sm:$0xff]
        %v882 = vld [vmem:[%s3 + $0xc8] sm:$0xff]
        %v883 = vld [vmem:[%s3 + $0xd0] sm:$0xff]
        %v884 = vld [vmem:[%s3 + $0xd8] sm:$0xff]
        %v885 = vld [vmem:[%s3 + $0xe0] sm:$0xff]
        %v886 = vld [vmem:[%s3 + $0xe8] sm:$0xff]
        %v887 = vld [vmem:[%s3 + $0xf0] sm:$0xff]
        %v888 = vld [vmem:[%s3 + $0xf8] sm:$0xff]
        %v889 = vld [vmem:[%s3 + $0x100] sm:$0xff]
        %v890 = vld [vmem:[%s3 + $0x108] sm:$0xff]
        %v891 = vld [vmem:[%s3 + $0x110] sm:$0xff]
        %v892 = vld [vmem:[%s3 + $0x118] sm:$0xff]
        %v893 = vld [vmem:[%s3 + $0x120] sm:$0xff]
        %v894 = vld [vmem:[%s3 + $0x128] sm:$0xff]
        %v895 = vld [vmem:[%s3 + $0x130] sm:$0xff]
        %v896 = vld [vmem:[%s3 + $0x138] sm:$0xff]
        %v897 = vld [vmem:[%s3 + $0x140] sm:$0xff]
        %v898 = vld [vmem:[%s3 + $0x148] sm:$0xff]
        %v899 = vld [vmem:[%s3 + $0x150] sm:$0xff]
        %v900 = vld [vmem:[%s3 + $0x158] sm:$0xff]
        %v901 = vld [vmem:[%s3 + $0x160] sm:$0xff]
        %v902 = vld [vmem:[%s3 + $0x168] sm:$0xff]
        %v903 = vld [vmem:[%s3 + $0x170] sm:$0xff]
        %v904 = vld [vmem:[%s3 + $0x178] sm:$0xff]
        %v905 = vld [vmem:[%s3 + $0x180] sm:$0xff]
        %v906 = vld [vmem:[%s3 + $0x188] sm:$0xff]
        %v907 = vld [vmem:[%s3 + $0x190] sm:$0xff]
        %v908 = vld [vmem:[%s3 + $0x198] sm:$0xff]
        %v909 = vld [vmem:[%s3 + $0x1a0] sm:$0xff]
        %v910 = vld [vmem:[%s3 + $0x1a8] sm:$0xff]
        %v911 = vld [vmem:[%s3 + $0x1b0] sm:$0xff]
        %v912 = vld [vmem:[%s3 + $0x1b8] sm:$0xff]
        %v913 = vld [vmem:[%s3 + $0x1c0] sm:$0xff]
        %v914 = vld [vmem:[%s3 + $0x1c8] sm:$0xff]
        %v915 = vld [vmem:[%s3 + $0x1d0] sm:$0xff]
        %v916 = vld [vmem:[%s3 + $0x1d8] sm:$0xff]
        %v917 = vld [vmem:[%s3 + $0x1e0] sm:$0xff]
        %v918 = vld [vmem:[%s3 + $0x1e8] sm:$0xff]
        %v919 = vld [vmem:[%s3 + $0x1f0] sm:$0xff]
        %v920 = vld [vmem:[%s3 + $0x1f8] sm:$0xff]
        %v921 = vld [vmem:[%s4] sm:$0x1]
        %922 = vmatpush.msra.mxu0 %v872
        %923 = vmatpush.msra.mxu0 %v871
        %924 = vmatpush.msra.mxu0 %v870
        %925 = vmatpush.msra.mxu0 %v869
        %926 = vmatpush.msra.mxu0 %v868
        %927 = vmatpush.msra.mxu0 %v867
        %928 = vmatpush.msra.mxu0 %v866
        %929 = vmatpush.msra.mxu0 %v865
        %930 = vmatpush.msra.mxu0 %v864
        %931 = vmatpush.msra.mxu0 %v863
        %932 = vmatpush.msra.mxu0 %v862
        %933 = vmatpush.msra.mxu0 %v861
        %934 = vmatpush.msra.mxu0 %v860
        %935 = vmatpush.msra.mxu0 %v859
        %936 = vmatpush.msra.mxu0 %v858
        %937 = vmatpush.msra.mxu0 %v857
        %938 = vmatmul.f32.gmra.mxu0 %v853
        %v939 = vpop.f32.mrf.mxu0
        %v940 = vadd.f32 %v921, %v939
        %941 = vdwg.mxu0
        %942 = vmatpush.msra.mxu0 %v888
        %943 = vmatpush.msra.mxu0 %v887
        %944 = vmatpush.msra.mxu0 %v886
        %945 = vmatpush.msra.mxu0 %v885
        %946 = vmatpush.msra.mxu0 %v884
        %947 = vmatpush.msra.mxu0 %v883
        %948 = vmatpush.msra.mxu0 %v882
        %949 = vmatpush.msra.mxu0 %v881
        %950 = vmatpush.msra.mxu0 %v880
        %951 = vmatpush.msra.mxu0 %v879
        %952 = vmatpush.msra.mxu0 %v878
        %953 = vmatpush.msra.mxu0 %v877
        %954 = vmatpush.msra.mxu0 %v876
        %955 = vmatpush.msra.mxu0 %v875
        %956 = vmatpush.msra.mxu0 %v874
        %957 = vmatpush.msra.mxu0 %v873
        %958 = vmatmul.f32.gmra.mxu0 %v854
        %v959 = vpop.f32.mrf.mxu0
        %v960 = vadd.f32 %v940, %v959
        %961 = vdwg.mxu0
        %962 = vmatpush.msra.mxu0 %v904
        %963 = vmatpush.msra.mxu0 %v903
        %964 = vmatpush.msra.mxu0 %v902
        %965 = vmatpush.msra.mxu0 %v901
        %966 = vmatpush.msra.mxu0 %v900
        %967 = vmatpush.msra.mxu0 %v899
        %968 = vmatpush.msra.mxu0 %v898
        %969 = vmatpush.msra.mxu0 %v897
        %970 = vmatpush.msra.mxu0 %v896
        %971 = vmatpush.msra.mxu0 %v895
        %972 = vmatpush.msra.mxu0 %v894
        %973 = vmatpush.msra.mxu0 %v893
        %974 = vmatpush.msra.mxu0 %v892
        %975 = vmatpush.msra.mxu0 %v891
        %976 = vmatpush.msra.mxu0 %v890
        %977 = vmatpush.msra.mxu0 %v889
        %978 = vmatmul.f32.gmra.mxu0 %v855
        %v979 = vpop.f32.mrf.mxu0
        %v980 = vadd.f32 %v960, %v979
        %981 = vdwg.mxu0
        %982 = vmatpush.msra.mxu0 %v920
        %983 = vmatpush.msra.mxu0 %v919
        %984 = vmatpush.msra.mxu0 %v918
        %985 = vmatpush.msra.mxu0 %v917
        %986 = vmatpush.msra.mxu0 %v916
        %987 = vmatpush.msra.mxu0 %v915
        %988 = vmatpush.msra.mxu0 %v914
        %989 = vmatpush.msra.mxu0 %v913
        %990 = vmatpush.msra.mxu0 %v912
        %991 = vmatpush.msra.mxu0 %v911
        %992 = vmatpush.msra.mxu0 %v910
        %993 = vmatpush.msra.mxu0 %v909
        %994 = vmatpush.msra.mxu0 %v908
        %995 = vmatpush.msra.mxu0 %v907
        %996 = vmatpush.msra.mxu0 %v906
        %997 = vmatpush.msra.mxu0 %v905
        %998 = vmatmul.f32.gmra.mxu0 %v856
        %v999 = vpop.f32.mrf.mxu0
        %v1000 = vadd.f32 %v980, %v999
        %1001 = vdwg.mxu0
        %1002 = vst [vmem:[%s216] sm:$0x1] %v1000
        %s1003 = sand.u32 %s137, 1
        %s1004 = scalar_lea.sflag [#allocation3], %s1003
        %s1005 = sand.u32 %s137, 1
        %s1006 = scalar_lea.vmem [#allocation2], %s1005
        // Predicated region
        $region41: #{mvtec_forward.1} parent=39 // pred_check
          %p1007 = pneg %p147
        $region42: #{mvtec_forward.1} parent=39 // pred_check_branch
          %1009 = sbr.rel (%p1007) target = $region44
        $region43: #{mvtec_forward.1} parent=39 // pred_region
          %1011 = vsyncadd %s1004, 0
          %s1012 = scalar_lea.hbm %s5, %s19
          %s1014 = sshll.u32 %s1006, 4
          %s1015 = int_to_ptr.vmem [resolvable:$true] %s1014
          %s1016 = sshll.u32 %s1012, 4
          %s1017 = int_to_ptr.hbm [resolvable:$true] %s1016
          %1019 = dma.vmem_to_hbm [thread:$0]  %s1015, 16, %s1017, %s1004
        $region44: #{mvtec_forward.1} parent=39 // pred_fallthru
          _
      $region40: #{mvtec_forward.1} parent=5 // pred_fallthru
        _
      %p1020 = scmp.le.s32.totalorder 2, %s14
      // Predicated region
      $region45: #{mvtec_forward.1} parent=5 // pred_check
        %p1021 = pneg %p1020
      $region46: #{mvtec_forward.1} parent=5 // pred_check_branch
        %1023 = sbr.rel (%p1021) target = $region48
      $region47: #{mvtec_forward.1} parent=5 // pred_region
        %s1024 = ssub.s32 %s14, 2
        // Predicated region
        $region49: #{mvtec_forward.1} parent=47 // pred_check
          %p1025 = pneg %p153
        $region50: #{mvtec_forward.1} parent=47 // pred_check_branch
          %1027 = sbr.rel (%p1025) target = $region52
        $region51: #{mvtec_forward.1} parent=47 // pred_region
          %s1028 = sand.u32 %s138, 1
          %s1029 = scalar_lea.sflag [#allocation3], %s1028
          %s1030 = sand.u32 %s138, 1
          %s1031 = scalar_lea.vmem [#allocation2], %s1030
          %1033 = dma.done %s1029, 16
        $region52: #{mvtec_forward.1} parent=47 // pred_fallthru
          _
      $region48: #{mvtec_forward.1} parent=5 // pred_fallthru
        _
    $region6: #{mvtec_forward.1} parent=1 // loop_footer
      %s18 = sadd.s32 1, %s14
    $region7: #{mvtec_forward.1} parent=1 // loop_footer_branch
      %13 = sbr.rel target = $region3
    $region8: #{mvtec_forward.1} parent=1 // loop_exit
      _
    %1034 = vsyncpa [#allocation3], 1
    %s1035 = scalar_lea.sflag [#allocation3], 1
    %1036 = vsyncpa %s1035, 1

</llo_original>
